<compile_context>
chip_gen: v7x
topology: tpu7x:2x2x1
jax: 0.10.0
libtpu: 0.0.40
codegen_flags: <defaults>
</compile_context>

<pallas_src>
import functools

import jax
import jax.numpy as jnp
from jax.experimental import pallas as pl
from jax.experimental.pallas import tpu as pltpu


def _schedule(sched, step):
    # Utils.schedule: numeric schedules are constants (entropy_sched=1 default).
    # TODO(synk): string "linear(a,b,n)" schedule specs not implemented.
    del step
    return float(sched)


def _critic_actor_kernel(mean_ref, std_ref, logp_ref, slab_ref,
                         *, exploit_temp, inv_entropy_temp):
    q = mean_ref[...]                                    # [TB, N] f32 (sample_q=False -> Q.mean)
    std = std_ref[...]                                   # [TB, N] f32

    # u = exploit_temp * q + (1 - exploit_temp) * Q.stddev
    u = exploit_temp * q + (1.0 - exploit_temp) * std
    u_max = jnp.max(u, axis=-1, keepdims=True)           # [TB, 1]  (== best_u)

    # softmax((u - max u) / T + actions_log_prob):
    #   * the scalar actions_log_prob shift cancels in the softmax,
    #   * the centered logits already have row-max == 0,
    # so only one cross-lane max and one cross-lane sum are needed.
    logits_c = (u - u_max) * inv_entropy_temp
    e = jnp.exp(logits_c)                                 # EUP
    s = jnp.sum(e, axis=-1, keepdims=True)                # [TB, 1]
    log_probs = logits_c - jnp.log(s)

    # best_eps, best_ind = torch.max(u, -1)  (first maximal index)
    TB, N = u.shape
    col = jax.lax.broadcasted_iota(jnp.int32, (TB, N), 1)
    best_ind = jnp.min(jnp.where(u == u_max, col, N), axis=-1, keepdims=True)  # [TB, 1]

    logp_ref[...] = log_probs

    # Pack best_u / best_ind into one lane-dense [TB, 128] f32 slab so the small
    # per-row scalars go out as a single unmasked vst stream / one output DMA.
    # best_ind travels as a float value (exact for N < 2**24); the wrapper casts
    # it back to int32.
    lanes = jax.lax.broadcasted_iota(jnp.int32, slab_ref.shape, 1)
    ind_f = best_ind.astype(jnp.float32)
    slab_ref[...] = jnp.where(lanes == 0, u_max,
                              jnp.where(lanes == 1, ind_f, 0.0))


def _choose_tile(B, N, block_b):
    """Pick (TB, n_blocks) with no padding and no output slicing.

    * B not a multiple of 8 -> a single block equal to the full batch dim
      (the (8,128) divisibility rule does not apply when block == array dim).
    * Otherwise -> the largest multiple-of-8 divisor of B that fits block_b and
      a conservative per-tile VMEM budget, preferring >= 2 tiles when B >= 16
      so the "parallel" grid axis can shard across both v7x TensorCores.
    """
    # Per-tile double-buffered footprint: inputs 2*TB*N*4, outputs
    # TB*N*4 + TB*128*4, x2 for double buffering.  Keep under 8 MiB so the
    # default scoped VMEM limit is safe on every generation (v5e: 16 MiB).
    vmem_budget = 8 * 1024 * 1024
    per_row = (3 * N + 128) * 4 * 2
    cap = max(8, (vmem_budget // per_row) // 8 * 8)
    block_b = min(block_b, cap)

    if B % 8 != 0 or B <= 8:
        # TODO(synk): very large ragged batches would want a masked boundary
        # tile instead of one full-batch block; not needed at these sizes.
        return B, 1

    limit = min(block_b, B // 2 if B >= 16 else B)
    best = 8
    tb = 8
    while tb <= limit:
        if B % tb == 0:
            best = tb
        tb += 8
    return best, B // best


def categorical_critic_actor(mean, stddev, action, *,
                             entropy_sched=1, step=None,
                             exploit_temp=1.0, actions_log_prob=0.0,
                             block_b=512):
    """Pallas implementation of CategoricalCriticActor.forward (sample_q=False).

    Returns (probs, log_probs, u, q, best_u, best_ind, best_action).
    `actions_log_prob` is accepted for API parity; as a scalar logit shift it
    cancels inside the Categorical softmax and does not affect any output.
    """
    del actions_log_prob
    B, N = mean.shape
    entropy_temp = _schedule(entropy_sched, step)

    TB, n_blocks = _choose_tile(B, N, block_b)

    kernel = functools.partial(
        _critic_actor_kernel,
        exploit_temp=float(exploit_temp),
        inv_entropy_temp=1.0 / float(entropy_temp),
    )

    out_shapes = (
        jax.ShapeDtypeStruct((B, N), jnp.float32),     # log_probs
        jax.ShapeDtypeStruct((B, 128), jnp.float32),   # packed best_u / best_ind
    )

    grid_spec = pltpu.PrefetchScalarGridSpec(
        num_scalar_prefetch=0,
        grid=(n_blocks,),
        in_specs=[
            pl.BlockSpec((TB, N), lambda i: (i, 0)),
            pl.BlockSpec((TB, N), lambda i: (i, 0)),
        ],
        out_specs=[
            pl.BlockSpec((TB, N), lambda i: (i, 0)),
            pl.BlockSpec((TB, 128), lambda i: (i, 0)),
        ],
    )

    log_probs, slab = pl.pallas_call(
        kernel,
        out_shape=out_shapes,
        grid_spec=grid_spec,
        compiler_params=pltpu.CompilerParams(
            # Batch tiles are independent -> shard across TensorCores on v7x.
            dimension_semantics=("parallel",)),
    )(mean.astype(jnp.float32), stddev.astype(jnp.float32))

    # Cheap recompute in the wrapper (XLA fuses with the consumer) instead of
    # extra HBM write streams out of the kernel; probs == exp(log_probs) exactly.
    probs = jnp.exp(log_probs)
    u = exploit_temp * mean + (1.0 - exploit_temp) * stddev
    q = mean                                              # Q.mean verbatim, no copy

    best_u = slab[:, :1]                                  # [B, 1]
    best_ind = slab[:, 1:2].astype(jnp.int32)             # [B, 1]

    # Gather of Q.action stays out of the kernel: one row per batch element is
    # tiny HBM traffic vs. streaming the whole [B, N, A] tensor through VMEM
    # (and needs no wrapper-side transpose pass).
    best_action = jnp.take_along_axis(action, best_ind[:, :, None], axis=1)[:, 0]

    return probs, log_probs, u, q, best_u, best_ind, best_action


def _reference(mean, stddev, action, exploit_temp, entropy_temp, actions_log_prob):
    q = mean
    u = exploit_temp * q + (1.0 - exploit_temp) * stddev
    u_logits = u - jnp.max(u, axis=-1, keepdims=True)
    logits = u_logits / entropy_temp + actions_log_prob
    log_probs = jax.nn.log_softmax(logits, axis=-1)
    probs = jnp.exp(log_probs)
    best_u = jnp.max(u, axis=-1)
    best_ind = jnp.argmax(u, axis=-1).astype(jnp.int32)
    best_action = jnp.take_along_axis(action, best_ind[:, None, None], axis=1)[:, 0]
    return probs, log_probs, u, q, best_u, best_ind, best_action


def _check(B, N, A, exploit_temp, block_b, seed):
    key = jax.random.PRNGKey(seed)
    k1, k2, k3 = jax.random.split(key, 3)
    mean = jax.random.normal(k1, (B, N), jnp.float32)
    stddev = jax.nn.softplus(jax.random.normal(k2, (B, N), jnp.float32))
    action = jax.random.normal(k3, (B, N, A), jnp.float32)

    outs = categorical_critic_actor(
        mean, stddev, action,
        entropy_sched=1, step=None,
        exploit_temp=exploit_temp, actions_log_prob=0.0,
        block_b=block_b)
    outs = jax.block_until_ready(outs)
    probs, log_probs, u, q, best_u, best_ind, best_action = outs

    r_probs, r_logp, r_u, r_q, r_best_u, r_best_ind, r_best_act = _reference(
        mean, stddev, action, exploit_temp, 1.0, 0.0)

    assert jnp.allclose(probs, r_probs, atol=1e-5, rtol=1e-5)
    assert jnp.allclose(log_probs, r_logp, atol=1e-5, rtol=1e-5)
    assert jnp.allclose(u, r_u, atol=1e-5, rtol=1e-5)
    assert jnp.allclose(q, r_q)
    assert jnp.allclose(best_u[:, 0], r_best_u, atol=1e-5, rtol=1e-5)
    assert jnp.array_equal(best_ind[:, 0], r_best_ind)
    assert jnp.allclose(best_action, r_best_act, atol=1e-5, rtol=1e-5)


if __name__ == "__main__":
    # Small single-block case (whole batch fits one tile).
    _check(B=8, N=128, A=8, exploit_temp=0.5, block_b=512, seed=0)
    # Multi-block case exercising batch tiling across 4 grid steps (TB=8).
    _check(B=32, N=128, A=8, exploit_temp=0.25, block_b=8, seed=1)
    # Wider candidate axis (N=256, two lane vregs), 2 tiles (v7x megacore path).
    _check(B=16, N=256, A=4, exploit_temp=0.75, block_b=512, seed=2)
    # Ragged batch (B not a multiple of 8) -> single full-batch block, no padding.
    _check(B=20, N=128, A=8, exploit_temp=0.25, block_b=512, seed=3)

    # TODO(synk): stochastic paths (Q.rsample when sample_q=True, Psi.sample /
    # action_sampler) are RNG draws outside the deterministic hot path; the
    # returned probs/log_probs fully define Psi for sampling in plain JAX.
    # TODO(synk): N that is not a multiple of 128 relies on Mosaic lane-padding
    # masks for the row reductions; verify on hardware before shipping such N.
    print("KERNEL_OK")
</pallas_src>

<mosaic_0001>
module attributes {stable_mosaic.version = 11 : i64} {
  func.func @_critic_actor_kernel(%arg0: i32, %arg1: memref<8x128xf32, #tpu.memory_space<vmem>>, %arg2: memref<8x128xf32, #tpu.memory_space<vmem>>, %arg3: memref<8x128xf32, #tpu.memory_space<vmem>>, %arg4: memref<8x128xf32, #tpu.memory_space<vmem>>) attributes {dimension_semantics = [#tpu.dimension_semantics<parallel>], iteration_bounds = array<i64: 1>, scalar_prefetch = 0 : i64, scratch_operands = 0 : i64, tpu.core_type = #tpu.core_type<tc>, window_params = [{transform_indices = @transform_0, window_bounds = array<i64: 8, 128>}, {transform_indices = @transform_1, window_bounds = array<i64: 8, 128>}, {transform_indices = @transform_2, window_bounds = array<i64: 8, 128>}, {transform_indices = @transform_3, window_bounds = array<i64: 8, 128>}]} {
    %c0 = arith.constant 0 : index
    %c0_0 = arith.constant 0 : index
    %0 = vector.load %arg1[%c0, %c0_0] : memref<8x128xf32, #tpu.memory_space<vmem>>, vector<8x128xf32>
    %c0_1 = arith.constant 0 : index
    %c0_2 = arith.constant 0 : index
    %1 = vector.load %arg2[%c0_1, %c0_2] : memref<8x128xf32, #tpu.memory_space<vmem>>, vector<8x128xf32>
    %cst = arith.constant 5.000000e-01 : f32
    %2 = vector.broadcast %cst : f32 to vector<8x128xf32>
    %3 = arith.mulf %2, %0 : vector<8x128xf32>
    %cst_3 = arith.constant 5.000000e-01 : f32
    %4 = vector.broadcast %cst_3 : f32 to vector<8x128xf32>
    %5 = arith.mulf %4, %1 : vector<8x128xf32>
    %6 = arith.addf %3, %5 : vector<8x128xf32>
    %cst_4 = arith.constant dense<0xFF800000> : vector<8xf32>
    %7 = vector.multi_reduction <maximumf>, %6, %cst_4 [1] : vector<8x128xf32> to vector<8xf32>
    %8 = vector.shape_cast %7 : vector<8xf32> to vector<8x1xf32>
    %9 = vector.broadcast %8 : vector<8x1xf32> to vector<8x128xf32>
    %10 = arith.subf %6, %9 : vector<8x128xf32>
    %cst_5 = arith.constant 1.000000e+00 : f32
    %11 = vector.broadcast %cst_5 : f32 to vector<8x128xf32>
    %12 = arith.mulf %10, %11 : vector<8x128xf32>
    %13 = math.exp %12 : vector<8x128xf32>
    %cst_6 = arith.constant dense<0.000000e+00> : vector<8xf32>
    %14 = vector.multi_reduction <add>, %13, %cst_6 [1] : vector<8x128xf32> to vector<8xf32>
    %15 = vector.shape_cast %14 : vector<8xf32> to vector<8x1xf32>
    %16 = math.log %15 : vector<8x1xf32>
    %17 = vector.broadcast %16 : vector<8x1xf32> to vector<8x128xf32>
    %18 = arith.subf %12, %17 : vector<8x128xf32>
    %19 = tpu.iota {dimensions = array<i32: 1>} : vector<8x128xi32>
    %20 = vector.broadcast %8 : vector<8x1xf32> to vector<8x128xf32>
    %21 = arith.cmpf oeq, %6, %20 : vector<8x128xf32>
    %c128_i32 = arith.constant 128 : i32
    %22 = vector.broadcast %c128_i32 : i32 to vector<8x128xi32>
    %23 = arith.select %21, %19, %22 : vector<8x128xi1>, vector<8x128xi32>
    %cst_7 = arith.constant dense<2147483647> : vector<8xi32>
    %24 = vector.multi_reduction <minsi>, %23, %cst_7 [1] : vector<8x128xi32> to vector<8xi32>
    %25 = vector.shape_cast %24 : vector<8xi32> to vector<8x1xi32>
    %c0_8 = arith.constant 0 : index
    %c0_9 = arith.constant 0 : index
    %26 = vector.load %arg3[%c0_8, %c0_9] : memref<8x128xf32, #tpu.memory_space<vmem>>, vector<8x128xf32>
    tpu.vector_store %arg3[%c0_8, %c0_9], %18 {strides = array<i32>} : memref<8x128xf32, #tpu.memory_space<vmem>>, vector<8x128xf32>,
    %27 = tpu.iota {dimensions = array<i32: 1>} : vector<8x128xi32>
    %28 = arith.sitofp %25 : vector<8x1xi32> to vector<8x1xf32>
    %c0_i32 = arith.constant 0 : i32
    %29 = vector.broadcast %c0_i32 : i32 to vector<8x128xi32>
    %30 = arith.cmpi eq, %27, %29 : vector<8x128xi32>
    %c1_i32 = arith.constant 1 : i32
    %31 = vector.broadcast %c1_i32 : i32 to vector<8x128xi32>
    %32 = arith.cmpi eq, %27, %31 : vector<8x128xi32>
    %cst_10 = arith.constant 0.000000e+00 : f32
    %33 = vector.shape_cast %28 : vector<8x1xf32> to vector<8x1xf32>
    %34 = vector.broadcast %33 : vector<8x1xf32> to vector<8x128xf32>
    %35 = vector.broadcast %cst_10 : f32 to vector<8x128xf32>
    %36 = arith.select %32, %34, %35 : vector<8x128xi1>, vector<8x128xf32>
    %37 = vector.shape_cast %8 : vector<8x1xf32> to vector<8x1xf32>
    %38 = vector.broadcast %37 : vector<8x1xf32> to vector<8x128xf32>
    %39 = arith.select %30, %38, %36 : vector<8x128xi1>, vector<8x128xf32>
    %c0_11 = arith.constant 0 : index
    %c0_12 = arith.constant 0 : index
    %40 = vector.load %arg4[%c0_11, %c0_12] : memref<8x128xf32, #tpu.memory_space<vmem>>, vector<8x128xf32>
    tpu.vector_store %arg4[%c0_11, %c0_12], %39 {strides = array<i32>} : memref<8x128xf32, #tpu.memory_space<vmem>>, vector<8x128xf32>,
    return
  }
  func.func @transform_0(%arg0: i32) -> (i32, i32) {
    %c0_i32 = arith.constant 0 : i32
    %c0_i32_0 = arith.constant 0 : i32
    return %arg0, %c0_i32 : i32, i32
  }
  func.func @transform_1(%arg0: i32) -> (i32, i32) {
    %c0_i32 = arith.constant 0 : i32
    %c0_i32_0 = arith.constant 0 : i32
    return %arg0, %c0_i32 : i32, i32
  }
  func.func @transform_2(%arg0: i32) -> (i32, i32) {
    %c0_i32 = arith.constant 0 : i32
    %c0_i32_0 = arith.constant 0 : i32
    return %arg0, %c0_i32 : i32, i32
  }
  func.func @transform_3(%arg0: i32) -> (i32, i32) {
    %c0_i32 = arith.constant 0 : i32
    %c0_i32_0 = arith.constant 0 : i32
    return %arg0, %c0_i32 : i32, i32
  }
}

</mosaic_0001>

<llo_original>
// kernel: tpu_custom_call.1
$region0: #{tpu_custom_call.1}
  #allocation0 [shape = 'u32[]', space=smem, size = 0x4, offset = 0x4, fixed_abs, tag = 'smem constant byte address 0x4 - core index']
  #allocation1 [shape = 'u32[144,128]{1,0:T(1,128)}', space=vmem, size = 0x12000, scoped, tag = 'internal scratch']
  %s0 = inlined_call_operand.hbm [shape: f32[8,128], index: 0, kind: input, shape index: {}]
  %s1 = inlined_call_operand.hbm [shape: f32[8,128], index: 1, kind: input, shape index: {}]
  %s2 = inlined_call_operand.hbm [shape: f32[8,128], index: 2, kind: output, shape index: {0}]
  %s3 = inlined_call_operand.hbm [shape: f32[8,128], index: 3, kind: output, shape index: {1}]
  %4 = xla_tuple %s2, %s3
  %s5 = sld [smem:[#allocation0]]
  $region34: #{tpu_custom_call.1} parent=0
    _
  %s7 = ssub.s32 1, %s5
  %s8 = scalar_select 0, %s7, %s5
  $region1: #{tpu_custom_call.1} parent=0
    #allocation2 [shape = 'u8[4096]{0}', space=vmem, size = 0x1000, scoped, tag = 'input window, operand 0, single buffered']
    #allocation3 [shape = 's32[1]{0}', space=sflag, size = 0x4, scoped, tag = 'scoped memory for tpu_custom_call.1']
    #allocation4 [shape = 's32[1]{0}', space=sflag, size = 0x4, scoped, tag = 'scoped memory for tpu_custom_call.1']
    #allocation5 [shape = 'u8[4096]{0}', space=vmem, size = 0x1000, scoped, tag = 'input window, operand 1, single buffered']
    #allocation6 [shape = 's32[1]{0}', space=sflag, size = 0x4, scoped, tag = 'scoped memory for tpu_custom_call.1']
    #allocation7 [shape = 'u8[4096]{0}', space=vmem, size = 0x1000, scoped, tag = 'output window, operand 0, single buffered']
    #allocation8 [shape = 'u8[4096]{0}', space=vmem, size = 0x1000, scoped, tag = 'output window, operand 1, single buffered']
    #allocation9 [shape = 's32[1]{0}', space=sflag, size = 0x4, scoped, tag = 'scoped memory for tpu_custom_call.1']
    %9 = vsyncpa [#allocation3], 0
    %10 = vsyncpa [#allocation6], 0
    %11 = vsyncpa [#allocation4], 0
    %12 = vsyncpa [#allocation9], 0
    // Predicated region
    $region2: #{tpu_custom_call.1} parent=1 // pred_check
      _
    $region3: #{tpu_custom_call.1} parent=1 // pred_check_branch
      %14 = sbr.rel (0) target = $region5
    $region4: #{tpu_custom_call.1} parent=1 // pred_region
      %s16 = ssub.s32 128, 128
      %17 = vsyncadd [#allocation3], %s16
      %s19 = sshll.u32 [#allocation2], 4
      %s20 = int_to_ptr.vmem [resolvable:$true] %s19
      %22 = dma.hbm_to_vmem [thread:$0]  %s0, 128, %s20, [#allocation3]
    $region5: #{tpu_custom_call.1} parent=1 // pred_fallthru
      _
    // Predicated region
    $region6: #{tpu_custom_call.1} parent=1 // pred_check
      _
    $region7: #{tpu_custom_call.1} parent=1 // pred_check_branch
      %24 = sbr.rel (0) target = $region9
    $region8: #{tpu_custom_call.1} parent=1 // pred_region
      %s26 = ssub.s32 128, 128
      %27 = vsyncadd [#allocation6], %s26
      %s29 = sshll.u32 [#allocation5], 4
      %s30 = int_to_ptr.vmem [resolvable:$true] %s29
      %32 = dma.hbm_to_vmem [thread:$0]  %s1, 128, %s30, [#allocation6]
    $region9: #{tpu_custom_call.1} parent=1 // pred_fallthru
      _
    // Predicated region
    $region10: #{tpu_custom_call.1} parent=1 // pred_check
      _
    $region11: #{tpu_custom_call.1} parent=1 // pred_check_branch
      %34 = sbr.rel (0) target = $region13
    $region12: #{tpu_custom_call.1} parent=1 // pred_region
      %35 = dma.done [#allocation3], 128
    $region13: #{tpu_custom_call.1} parent=1 // pred_fallthru
      _
    // Predicated region
    $region14: #{tpu_custom_call.1} parent=1 // pred_check
      _
    $region15: #{tpu_custom_call.1} parent=1 // pred_check_branch
      %37 = sbr.rel (0) target = $region17
    $region16: #{tpu_custom_call.1} parent=1 // pred_region
      %38 = dma.done [#allocation6], 128
    $region17: #{tpu_custom_call.1} parent=1 // pred_fallthru
      _
    %v39 = vld [vmem:[#allocation2] sm:$0xff]
    %v40 = vld [vmem:[#allocation5] sm:$0xff]
    %v41 = vmul.f32 %v39, 0.5
    %v42 = vmul.f32 %v40, 0.5
    %v43 = vadd.f32 %v41, %v42
    %44 = vmax.xlane.f32.xlu0 %v43
    %v45 = vpop.xlane.xlu0 %44
    %v46 = vsub.f32 %v43, %v45
    %v47 = vmul.f32 %v46, 1.442695
    %v48 = vpow.pop %v47
    %49 = vadd.xlane.f32.xlu0 %v48
    %v50 = vpop.xlane.xlu0 %49
    %v51 = vlog2.pop %v50
    %v52 = vmul.f32 %v51, 0.6931472
    %v53 = vsub.f32 %v46, %v52
    %v54 = vlaneseq
    %v55 = vand.u32 %v54, 127
    %vm56 = vcmp.eq.f32.partialorder %v43, %v45
    %v57 = vsel %vm56, %v55, 128
    %v58 = vand.u32 %v57, 65535
    %v59 = vshra.s32 %v57, 16
    %v60 = vcvt.s32.f32 %v58
    %v61 = vcvt.s32.f32 %v59
    %62 = vmin.xlane.f32.xlu0 %v61
    %v63 = vpop.xlane.xlu0 %62
    %vm64 = vcmp.eq.f32.partialorder %v61, %v63
    %v65 = vsel %vm64, %v60, inf
    %66 = vmin.xlane.f32.xlu0 %v65
    %v67 = vpop.xlane.xlu0 %66
    %v68 = vcvt.f32.s32 %v67
    %v69 = vcvt.f32.s32 %v63
    %v70 = vshll.u32 %v69, 16
    %v71 = vadd.s32 %v70, %v68
    %72 = vst [vmem:[#allocation7] sm:$0xff] %v53
    %v73 = vcvt.s32.f32 %v71
    %vm74 = vcmp.eq.s32.totalorder %v55, 0
    %vm75 = vcmp.eq.s32.totalorder %v55, 1
    %v76 = vsel %vm75, %v73, 0.0
    %v77 = vsel %vm74, %v45, %v76
    %78 = vst [vmem:[#allocation8] sm:$0xff] %v77
    // Predicated region
    $region18: #{tpu_custom_call.1} parent=1 // pred_check
      _
    $region19: #{tpu_custom_call.1} parent=1 // pred_check_branch
      %80 = sbr.rel (0) target = $region21
    $region20: #{tpu_custom_call.1} parent=1 // pred_region
      %s82 = ssub.s32 128, 128
      %83 = vsyncadd [#allocation4], %s82
      %s85 = sshll.u32 [#allocation7], 4
      %s86 = int_to_ptr.vmem [resolvable:$true] %s85
      %88 = dma.vmem_to_hbm [thread:$0]  %s86, 128, %s2, [#allocation4]
    $region21: #{tpu_custom_call.1} parent=1 // pred_fallthru
      _
    // Predicated region
    $region22: #{tpu_custom_call.1} parent=1 // pred_check
      _
    $region23: #{tpu_custom_call.1} parent=1 // pred_check_branch
      %90 = sbr.rel (0) target = $region25
    $region24: #{tpu_custom_call.1} parent=1 // pred_region
      %s92 = ssub.s32 128, 128
      %93 = vsyncadd [#allocation9], %s92
      %s95 = sshll.u32 [#allocation8], 4
      %s96 = int_to_ptr.vmem [resolvable:$true] %s95
      %98 = dma.vmem_to_hbm [thread:$0]  %s96, 128, %s3, [#allocation9]
    $region25: #{tpu_custom_call.1} parent=1 // pred_fallthru
      _
    // Predicated region
    $region26: #{tpu_custom_call.1} parent=1 // pred_check
      _
    $region27: #{tpu_custom_call.1} parent=1 // pred_check_branch
      %100 = sbr.rel (0) target = $region29
    $region28: #{tpu_custom_call.1} parent=1 // pred_region
      %101 = dma.done [#allocation4], 128
    $region29: #{tpu_custom_call.1} parent=1 // pred_fallthru
      _
    // Predicated region
    $region30: #{tpu_custom_call.1} parent=1 // pred_check
      _
    $region31: #{tpu_custom_call.1} parent=1 // pred_check_branch
      %103 = sbr.rel (0) target = $region33
    $region32: #{tpu_custom_call.1} parent=1 // pred_region
      %104 = dma.done [#allocation9], 128
    $region33: #{tpu_custom_call.1} parent=1 // pred_fallthru
      _
    %105 = vsyncpa [#allocation3], 1
    %106 = vsyncpa [#allocation6], 1
    %107 = vsyncpa [#allocation4], 1
    %108 = vsyncpa [#allocation9], 1

</llo_original>
